<compile_context>
chip_gen: v7x
topology: tpu7x:2x2x1
jax: 0.10.0
libtpu: 0.0.40
codegen_flags: <defaults>
</compile_context>

<pallas_src>
import jax
import jax.numpy as jnp
from jax.experimental import pallas as pl
from jax.experimental.pallas import tpu as pltpu


def _round_up(v, a):
    return ((v + a - 1) // a) * a


# ----------------------------------------------------------------------------
# Single-invocation fast path (used for the module's actual 3x3 shapes).
# ----------------------------------------------------------------------------
def _small_fused_kernel(x1_ref, x2_ref, inp1_ref, inp2_ref, o_ref):
    acc = jnp.dot(x1_ref[...], x2_ref[...], preferred_element_type=jnp.float32)
    o_ref[...] = (
        acc
        + inp1_ref[...].astype(jnp.float32)
        + inp2_ref[...].astype(jnp.float32)
    ).astype(o_ref.dtype)


# ----------------------------------------------------------------------------
# Tiled path kernels.
# ----------------------------------------------------------------------------
def _mm_bias_kernel_f32(x1_ref, x2_ref, inp1_ref, inp2_ref, o_ref):
    # Output dtype is f32: the output block is resident across the K axis
    # (same (i, j) block for every k), so accumulate directly into it.
    @pl.when(pl.program_id(2) == 0)
    def _():
        o_ref[...] = (
            inp1_ref[...].astype(jnp.float32)
            + inp2_ref[...].astype(jnp.float32)
        )

    o_ref[...] += jnp.dot(
        x1_ref[...], x2_ref[...], preferred_element_type=jnp.float32
    )


def _mm_bias_kernel_acc(x1_ref, x2_ref, inp1_ref, inp2_ref, o_ref, acc_ref):
    k = pl.program_id(2)

    @pl.when(k == 0)
    def _():
        acc_ref[...] = (
            inp1_ref[...].astype(jnp.float32)
            + inp2_ref[...].astype(jnp.float32)
        )

    acc_ref[...] += jnp.dot(
        x1_ref[...], x2_ref[...], preferred_element_type=jnp.float32
    )

    @pl.when(k == pl.num_programs(2) - 1)
    def _():
        o_ref[...] = acc_ref[...].astype(o_ref.dtype)


# ----------------------------------------------------------------------------
# Wrapper.
# ----------------------------------------------------------------------------
def model_forward(x1, x2, inp1, inp2, *, tm=512, tn=512, tk=512):
    M, K = x1.shape
    K2, N = x2.shape
    assert K == K2 and inp1.shape == (M, N) and inp2.shape == (M, N)
    out_dtype = jnp.result_type(x1.dtype, x2.dtype, inp1.dtype, inp2.dtype)

    bytes_accessed = (
        x1.size * x1.dtype.itemsize
        + x2.size * x2.dtype.itemsize
        + inp1.size * inp1.dtype.itemsize
        + inp2.size * inp2.dtype.itemsize
        + M * N * jnp.dtype(out_dtype).itemsize
    )
    cost = pl.CostEstimate(
        flops=2 * M * N * K, transcendentals=0, bytes_accessed=bytes_accessed
    )

    # ---------------- fast path: whole problem in one VMEM-resident tile ----
    fits_one_tile = (
        M <= 1024
        and N <= 1024
        and K <= 2048
        and (M * K + K * N + 3 * M * N) * 4 <= 8 * 1024 * 1024
    )
    if fits_one_tile:
        return pl.pallas_call(
            _small_fused_kernel,
            out_shape=jax.ShapeDtypeStruct((M, N), out_dtype),
            cost_estimate=cost,
            compiler_params=pltpu.CompilerParams(
                vmem_limit_bytes=32 * 1024 * 1024
            ),
        )(x1, x2, inp1, inp2)

    # ---------------- tiled path --------------------------------------------
    # Lane dims (N, K) aligned to 128, sublane dim (M) to 8.
    tm = min(tm, _round_up(M, 8))
    tn = min(tn, _round_up(N, 128))

    # Pick the K tile so the padding along K is minimal (still 128-aligned and
    # <= tk); the K tail MUST be zero-padded: garbage there would feed the
    # accumulation of valid outputs.  M / N tails need no padding -- OOB input
    # reads only affect masked output positions.
    tk = min(tk, _round_up(K, 128))
    k_steps = pl.cdiv(K, tk)
    tk = _round_up(pl.cdiv(K, k_steps), 128)
    Kp = k_steps * tk
    if Kp != K:
        x1 = jnp.pad(x1, ((0, 0), (0, Kp - K)))
        x2 = jnp.pad(x2, ((0, Kp - K), (0, 0)))

    # Megacore (v7x has 2 TensorCores): make sure at least one parallel grid
    # axis has extent >= 2 when the problem allows it.
    if pl.cdiv(M, tm) == 1 and pl.cdiv(N, tn) == 1:
        if M >= 16:
            tm = _round_up(pl.cdiv(M, 2), 8)
        elif N >= 256:
            tn = _round_up(pl.cdiv(N, 2), 128)

    grid = (pl.cdiv(M, tm), pl.cdiv(N, tn), k_steps)

    if out_dtype == jnp.float32:
        kernel = _mm_bias_kernel_f32
        scratch_shapes = []
    else:
        kernel = _mm_bias_kernel_acc
        scratch_shapes = [pltpu.VMEM((tm, tn), jnp.float32)]

    return pl.pallas_call(
        kernel,
        out_shape=jax.ShapeDtypeStruct((M, N), out_dtype),
        grid_spec=pltpu.PrefetchScalarGridSpec(
            num_scalar_prefetch=0,
            grid=grid,
            in_specs=[
                pl.BlockSpec((tm, tk), lambda i, j, k: (i, k)),  # x1
                pl.BlockSpec((tk, tn), lambda i, j, k: (k, j)),  # x2
                pl.BlockSpec((tm, tn), lambda i, j, k: (i, j)),  # inp1
                pl.BlockSpec((tm, tn), lambda i, j, k: (i, j)),  # inp2
            ],
            out_specs=pl.BlockSpec((tm, tn), lambda i, j, k: (i, j)),
            scratch_shapes=scratch_shapes,
        ),
        compiler_params=pltpu.CompilerParams(
            dimension_semantics=("parallel", "parallel", "arbitrary"),
            vmem_limit_bytes=32 * 1024 * 1024,
        ),
        cost_estimate=cost,
    )(x1, x2, inp1, inp2)


if __name__ == "__main__":
    key = jax.random.PRNGKey(0)
    k1, k2, k3, k4 = jax.random.split(key, 4)
    # Shapes implied by the module: 3x3 matrices (fast path).
    x1 = jax.random.normal(k1, (3, 3), dtype=jnp.float32)
    x2 = jax.random.normal(k2, (3, 3), dtype=jnp.float32)
    inp1 = jax.random.normal(k3, (3, 3), dtype=jnp.float32)
    inp2 = jax.random.normal(k4, (3, 3), dtype=jnp.float32)

    fwd = jax.jit(model_forward)
    out = fwd(x1, x2, inp1, inp2)
    jax.block_until_ready(out)

    ref = jnp.dot(x1, x2) + inp1 + inp2
    assert out.shape == (3, 3)
    assert jnp.allclose(out, ref, atol=1e-5, rtol=1e-5), "mismatch vs reference"

    # Also exercise the tiled path: non-divisible M/N edges (masked stores)
    # plus a zero-padded K tail and a multi-step reduction.
    kk = jax.random.split(jax.random.PRNGKey(1), 4)
    M, K, N = 520, 1100, 650
    a = jax.random.normal(kk[0], (M, K), dtype=jnp.float32)
    b = jax.random.normal(kk[1], (K, N), dtype=jnp.float32)
    c1 = jax.random.normal(kk[2], (M, N), dtype=jnp.float32)
    c2 = jax.random.normal(kk[3], (M, N), dtype=jnp.float32)
    out2 = jax.jit(model_forward)(a, b, c1, c2)
    jax.block_until_ready(out2)
    ref2 = jnp.dot(a, b) + c1 + c2
    assert jnp.allclose(out2, ref2, atol=2e-3, rtol=2e-3), "mismatch (tiled) vs reference"

    print("KERNEL_OK")
</pallas_src>

<mosaic_0001>
module attributes {stable_mosaic.version = 11 : i64} {
  func.func @_small_fused_kernel(%arg0: memref<3x3xf32, #tpu.memory_space<vmem>>, %arg1: memref<3x3xf32, #tpu.memory_space<vmem>>, %arg2: memref<3x3xf32, #tpu.memory_space<vmem>>, %arg3: memref<3x3xf32, #tpu.memory_space<vmem>>, %arg4: memref<3x3xf32, #tpu.memory_space<vmem>>) attributes {dimension_semantics = [], scalar_prefetch = 0 : i64, scratch_operands = 0 : i64, tpu.core_type = #tpu.core_type<tc>} {
    %c0 = arith.constant 0 : index
    %c0_0 = arith.constant 0 : index
    %0 = vector.load %arg0[%c0, %c0_0] : memref<3x3xf32, #tpu.memory_space<vmem>>, vector<3x3xf32>
    %c0_1 = arith.constant 0 : index
    %c0_2 = arith.constant 0 : index
    %1 = vector.load %arg1[%c0_1, %c0_2] : memref<3x3xf32, #tpu.memory_space<vmem>>, vector<3x3xf32>
    %cst = arith.constant dense<0.000000e+00> : vector<3x3xf32>
    %2 = tpu.matmul %0, %1, %cst {dimension_numbers = #tpu.dot_dimension_numbers<[1], [0], [0], [1], [0, 0, 1, 1], [], []>} : vector<3x3xf32>, vector<3x3xf32>, vector<3x3xf32> -> vector<3x3xf32>
    %c0_3 = arith.constant 0 : index
    %c0_4 = arith.constant 0 : index
    %3 = vector.load %arg2[%c0_3, %c0_4] : memref<3x3xf32, #tpu.memory_space<vmem>>, vector<3x3xf32>
    %4 = arith.addf %2, %3 : vector<3x3xf32>
    %c0_5 = arith.constant 0 : index
    %c0_6 = arith.constant 0 : index
    %5 = vector.load %arg3[%c0_5, %c0_6] : memref<3x3xf32, #tpu.memory_space<vmem>>, vector<3x3xf32>
    %6 = arith.addf %4, %5 : vector<3x3xf32>
    %c0_7 = arith.constant 0 : index
    %c0_8 = arith.constant 0 : index
    %7 = vector.load %arg4[%c0_7, %c0_8] : memref<3x3xf32, #tpu.memory_space<vmem>>, vector<3x3xf32>
    tpu.vector_store %arg4[%c0_7, %c0_8], %6 {strides = array<i32>} : memref<3x3xf32, #tpu.memory_space<vmem>>, vector<3x3xf32>,
    return
  }
}

</mosaic_0001>

<llo_original>
// kernel: model_forward.1
$region0: #{model_forward.1}
  #allocation0 [shape = 'u32[]', space=smem, size = 0x4, offset = 0x4, fixed_abs, tag = 'smem constant byte address 0x4 - core index']
  #allocation1 [shape = 'u32[144,128]{1,0:T(1,128)}', space=vmem, size = 0x12000, scoped, tag = 'internal scratch']
  %s0 = inlined_call_operand.hbm [shape: f32[3,3], index: 0, kind: input, shape index: {}]
  %s1 = inlined_call_operand.hbm [shape: f32[3,3], index: 1, kind: input, shape index: {}]
  %s2 = inlined_call_operand.vmem [shape: f32[3,3], index: 2, kind: input, shape index: {}]
  %s3 = inlined_call_operand.vmem [shape: f32[3,3], index: 3, kind: input, shape index: {}]
  %s4 = inlined_call_operand.hbm [shape: f32[3,3], index: 4, kind: output, shape index: {}]
  %s5 = sld [smem:[#allocation0]]
  $region34: #{model_forward.1} parent=0
    _
  %s7 = ssub.s32 1, %s5
  %s8 = scalar_select 0, %s7, %s5
  $region1: #{model_forward.1} parent=0
    #allocation2 [shape = 'u8[2048]{0}', space=vmem, size = 0x800, scoped, tag = 'input window, operand 0, single buffered']
    #allocation3 [shape = 's32[1]{0}', space=sflag, size = 0x4, scoped, tag = 'scoped memory for model_forward.1']
    #allocation4 [shape = 's32[1]{0}', space=sflag, size = 0x4, scoped, tag = 'scoped memory for model_forward.1']
    #allocation5 [shape = 'u8[2048]{0}', space=vmem, size = 0x800, scoped, tag = 'input window, operand 1, single buffered']
    #allocation6 [shape = 's32[1]{0}', space=sflag, size = 0x4, scoped, tag = 'scoped memory for model_forward.1']
    #allocation7 [shape = 'u8[2048]{0}', space=vmem, size = 0x800, scoped, tag = 'output window, operand 0, single buffered']
    %9 = vsyncpa [#allocation3], 0
    %10 = vsyncpa [#allocation6], 0
    %11 = vsyncpa [#allocation4], 0
    // Predicated region
    $region2: #{model_forward.1} parent=1 // pred_check
      _
    $region3: #{model_forward.1} parent=1 // pred_check_branch
      %13 = sbr.rel (0) target = $region5
    $region4: #{model_forward.1} parent=1 // pred_region
      %s15 = ssub.s32 64, 64
      %16 = vsyncadd [#allocation3], %s15
      %s18 = sshll.u32 [#allocation2], 4
      %s19 = int_to_ptr.vmem [resolvable:$true] %s18
      %21 = dma.hbm_to_vmem [thread:$0]  %s0, 64, %s19, [#allocation3]
    $region5: #{model_forward.1} parent=1 // pred_fallthru
      _
    // Predicated region
    $region6: #{model_forward.1} parent=1 // pred_check
      _
    $region7: #{model_forward.1} parent=1 // pred_check_branch
      %23 = sbr.rel (0) target = $region9
    $region8: #{model_forward.1} parent=1 // pred_region
      %s25 = ssub.s32 64, 64
      %26 = vsyncadd [#allocation6], %s25
      %s28 = sshll.u32 [#allocation5], 4
      %s29 = int_to_ptr.vmem [resolvable:$true] %s28
      %31 = dma.hbm_to_vmem [thread:$0]  %s1, 64, %s29, [#allocation6]
    $region9: #{model_forward.1} parent=1 // pred_fallthru
      _
    // Predicated region
    $region10: #{model_forward.1} parent=1 // pred_check
      _
    $region11: #{model_forward.1} parent=1 // pred_check_branch
      %33 = sbr.rel (0) target = $region13
    $region12: #{model_forward.1} parent=1 // pred_region
      _
    $region13: #{model_forward.1} parent=1 // pred_fallthru
      _
    // Predicated region
    $region14: #{model_forward.1} parent=1 // pred_check
      _
    $region15: #{model_forward.1} parent=1 // pred_check_branch
      %35 = sbr.rel (0) target = $region17
    $region16: #{model_forward.1} parent=1 // pred_region
      _
    $region17: #{model_forward.1} parent=1 // pred_fallthru
      _
    // Predicated region
    $region18: #{model_forward.1} parent=1 // pred_check
      _
    $region19: #{model_forward.1} parent=1 // pred_check_branch
      %37 = sbr.rel (0) target = $region21
    $region20: #{model_forward.1} parent=1 // pred_region
      %38 = dma.done [#allocation3], 64
    $region21: #{model_forward.1} parent=1 // pred_fallthru
      _
    // Predicated region
    $region22: #{model_forward.1} parent=1 // pred_check
      _
    $region23: #{model_forward.1} parent=1 // pred_check_branch
      %40 = sbr.rel (0) target = $region25
    $region24: #{model_forward.1} parent=1 // pred_region
      %41 = dma.done [#allocation6], 64
    $region25: #{model_forward.1} parent=1 // pred_fallthru
      _
    %v42 = vld [vmem:[#allocation2] sm:$0x7]
    %v43 = vld [vmem:[#allocation5] sm:$0x7]
    %v44 = vld [vmem:[%s2] sm:$0x7]
    %vm45 = vcmask 23552
    %v47 = vsel %vm45, %v42, 0
    %vm49 = vcmask 1042432
    %v51 = vsel %vm49, %v43, 0
    %53 = vmatprep.subr.mxu0 0.0
    %54 = vmatpush1.msra.mxu0 %v51
    %55 = vmatprep.subr.mxu0 0.0
    %56 = vmatpush1.msra.mxu0 0.0
    %57 = vmatprep.subr.mxu0 0.0
    %58 = vmatpush1.msra.mxu0 0.0
    %59 = vmatprep.subr.mxu0 0.0
    %60 = vmatpush1.msra.mxu0 0.0
    %61 = vmatprep.subr.mxu0 0.0
    %62 = vmatpush1.msra.mxu0 0.0
    %63 = vmatprep.subr.mxu0 0.0
    %64 = vmatpush1.msra.mxu0 0.0
    %65 = vmatprep.subr.mxu0 0.0
    %66 = vmatpush1.msra.mxu0 0.0
    %67 = vmatprep.subr.mxu0 0.0
    %68 = vmatpush1.msra.mxu0 0.0
    %69 = vmatprep.subr.mxu0 0.0
    %70 = vmatpush1.msra.mxu0 0.0
    %71 = vmatprep.subr.mxu0 0.0
    %72 = vmatpush1.msra.mxu0 0.0
    %73 = vmatprep.subr.mxu0 0.0
    %74 = vmatpush1.msra.mxu0 0.0
    %75 = vmatprep.subr.mxu0 0.0
    %76 = vmatpush1.msra.mxu0 0.0
    %77 = vmatprep.subr.mxu0 0.0
    %78 = vmatpush1.msra.mxu0 0.0
    %79 = vmatprep.subr.mxu0 0.0
    %80 = vmatpush1.msra.mxu0 0.0
    %81 = vmatprep.subr.mxu0 0.0
    %82 = vmatpush1.msra.mxu0 0.0
    %83 = vmatprep.subr.mxu0 0.0
    %84 = vmatpush1.msra.mxu0 0.0
    %85 = vmatprep.subr.mxu0 0.0
    %86 = vmatpush1.msra.mxu0 0.0
    %87 = vmatprep.subr.mxu0 0.0
    %88 = vmatpush1.msra.mxu0 0.0
    %89 = vmatprep.subr.mxu0 0.0
    %90 = vmatpush1.msra.mxu0 0.0
    %91 = vmatprep.subr.mxu0 0.0
    %92 = vmatpush1.msra.mxu0 0.0
    %93 = vmatprep.subr.mxu0 0.0
    %94 = vmatpush1.msra.mxu0 0.0
    %95 = vmatprep.subr.mxu0 0.0
    %96 = vmatpush1.msra.mxu0 0.0
    %97 = vmatprep.subr.mxu0 0.0
    %98 = vmatpush1.msra.mxu0 0.0
    %99 = vmatprep.subr.mxu0 0.0
    %100 = vmatpush1.msra.mxu0 0.0
    %101 = vmatprep.subr.mxu0 0.0
    %102 = vmatpush1.msra.mxu0 0.0
    %103 = vmatprep.subr.mxu0 0.0
    %104 = vmatpush1.msra.mxu0 0.0
    %105 = vmatprep.subr.mxu0 0.0
    %106 = vmatpush1.msra.mxu0 0.0
    %107 = vmatprep.subr.mxu0 0.0
    %108 = vmatpush1.msra.mxu0 0.0
    %109 = vmatprep.subr.mxu0 0.0
    %110 = vmatpush1.msra.mxu0 0.0
    %111 = vmatprep.subr.mxu0 0.0
    %112 = vmatpush1.msra.mxu0 0.0
    %113 = vmatprep.subr.mxu0 0.0
    %114 = vmatpush1.msra.mxu0 0.0
    %115 = vmatprep.subr.mxu0 0.0
    %116 = vmatpush1.msra.mxu0 0.0
    %117 = vmatprep.mubr.f32.mxu0 0.0
    %118 = vmatmul.mubr.f32.gmra.mrb[0].mxu0 %v47
    %v119 = vpop.f32.mrb[0].mxu0
    %v120 = vadd.f32 %v44, %v119
    %v121 = vpop.f32.mrb[0].mxu0
    %122 = vdwg.mxu0
    %v123 = vld [vmem:[%s3] sm:$0x7]
    %v124 = vadd.f32 %v120, %v123
    %vm125 = vcmask 18432
    %126 = vst.msk [vmem:[#allocation7] sm:$0x7] %vm125, %v124
    // Predicated region
    $region26: #{model_forward.1} parent=1 // pred_check
      _
    $region27: #{model_forward.1} parent=1 // pred_check_branch
      %128 = sbr.rel (0) target = $region29
    $region28: #{model_forward.1} parent=1 // pred_region
      %s130 = ssub.s32 64, 64
      %131 = vsyncadd [#allocation4], %s130
      %s133 = sshll.u32 [#allocation7], 4
      %s134 = int_to_ptr.vmem [resolvable:$true] %s133
      %136 = dma.vmem_to_hbm [thread:$0]  %s134, 64, %s4, [#allocation4]
    $region29: #{model_forward.1} parent=1 // pred_fallthru
      _
    // Predicated region
    $region30: #{model_forward.1} parent=1 // pred_check
      _
    $region31: #{model_forward.1} parent=1 // pred_check_branch
      %138 = sbr.rel (0) target = $region33
    $region32: #{model_forward.1} parent=1 // pred_region
      %139 = dma.done [#allocation4], 64
    $region33: #{model_forward.1} parent=1 // pred_fallthru
      _
    %140 = vsyncpa [#allocation3], 1
    %141 = vsyncpa [#allocation6], 1
    %142 = vsyncpa [#allocation4], 1

</llo_original>
